<compile_context>
chip_gen: v7x
topology: tpu7x:2x2x1
jax: 0.10.0
libtpu: 0.0.40
codegen_flags: <defaults>
</compile_context>

<pallas_src>
import math

import jax
import jax.numpy as jnp
from jax.experimental import pallas as pl
from jax.experimental.pallas import tpu as pltpu


def _fixed_embedding_table(c_in: int, d_model: int) -> jnp.ndarray:
    """Deterministic sinusoidal table identical to the PyTorch __init__."""
    position = jnp.arange(0, c_in, dtype=jnp.float32)[:, None]           # (c_in, 1)
    div_term = jnp.exp(
        jnp.arange(0, d_model, 2, dtype=jnp.float32)
        * (-math.log(10000.0) / d_model)
    )                                                                     # (ceil(d/2),)
    w = jnp.zeros((c_in, d_model), dtype=jnp.float32)
    w = w.at[:, 0::2].set(jnp.sin(position * div_term))
    n_cos = d_model // 2                                                  # handles odd d_model
    w = w.at[:, 1::2].set(jnp.cos(position * div_term[:n_cos]))
    return w


def _embed_kernel(tgt_ref, w_ref, o_ref):
    # tgt_ref: (TP, pack) int32 -- precomputed target lane (idx + p*c_in), -1 if OOB
    # w_ref:   (pack*c_in, pack*d_model) f32 block-diagonal table (VMEM resident)
    # o_ref:   (TP, pack*d_model) f32 -- lane-dense packed output tile
    tgt = tgt_ref[...]                                        # (TP, pack)
    tp, pack = tgt.shape
    pcin = w_ref.shape[0]

    lanes = jax.lax.broadcasted_iota(jnp.int32, (tp, pcin), 1)
    onehot = jnp.zeros((tp, pcin), dtype=jnp.float32)
    for p in range(pack):                                     # static & small -> unrolled
        # one compare + one select per pack; OOB target (-1) never matches a lane
        onehot = jnp.where(lanes == tgt[:, p:p + 1], 1.0, onehot)

    # Exact gather: single 1.0 per sub-block times f32 table entries, f32 acc.
    # precision=HIGHEST keeps the f32 operands from being demoted to bf16.
    o_ref[...] = jnp.dot(
        onehot, w_ref[...],
        preferred_element_type=jnp.float32,
        precision=jax.lax.Precision.HIGHEST,
    )


def _fixed_embedding_call(x, w_blk, *, c_in, d_model, pack, tile_n):
    orig_shape = x.shape
    flat = x.reshape(-1).astype(jnp.int32)
    n = flat.shape[0]

    # Tile sizing: tile_n tokens per step, multiple of unit = pack*8 so the
    # packed block has >= 8 sublanes; clamp to the (rounded-up) problem size
    # so tiny inputs don't pad to tile_n, and cap at ~half the problem so the
    # "parallel" grid keeps >= 2 steps for v7x's two TensorCores.
    unit = pack * 8
    n_unit = pl.cdiv(n, unit) * unit
    tile_eff = min(tile_n, n_unit)
    if n_unit >= 2 * unit:
        tile_eff = min(tile_eff, pl.cdiv(n_unit, 2 * unit) * unit)
    tile_eff = max(unit, (tile_eff // unit) * unit)
    n_pad = pl.cdiv(n, tile_eff) * tile_eff
    if n_pad != n:
        flat = jnp.pad(flat, (0, n_pad - n))      # pad with index 0 (in range); sliced off below

    n_packed = n_pad // pack
    tp = tile_eff // pack
    out_lanes = pack * d_model

    # Precompute target lanes on the tiny int32 index array (XLA-land), so the
    # kernel's one-hot build is just compare+select (perf review item 2).
    idx2d = flat.reshape(n_packed, pack)          # row r holds the pack indices of packed row r
    offs = (jnp.arange(pack, dtype=jnp.int32) * c_in)[None, :]
    in_range = (idx2d >= 0) & (idx2d < c_in)
    tgt = jnp.where(in_range, idx2d + offs, jnp.int32(-1))   # (n_packed, pack)

    grid = (n_pad // tile_eff,)

    flops = 2 * n_packed * (pack * c_in) * out_lanes
    bytes_accessed = (n_packed * pack * 4                 # target lanes in
                      + (pack * c_in) * out_lanes * 4     # table in (once)
                      + n_packed * out_lanes * 4)         # output out

    out = pl.pallas_call(
        _embed_kernel,
        out_shape=jax.ShapeDtypeStruct((n_packed, out_lanes), jnp.float32),
        grid_spec=pltpu.PrefetchScalarGridSpec(
            num_scalar_prefetch=0,
            grid=grid,
            in_specs=[
                pl.BlockSpec((tp, pack), lambda i: (i, 0)),
                pl.BlockSpec((pack * c_in, out_lanes), lambda i: (0, 0)),
            ],
            out_specs=pl.BlockSpec((tp, out_lanes), lambda i: (i, 0)),
        ),
        compiler_params=pltpu.CompilerParams(
            dimension_semantics=("parallel",),
        ),
        cost_estimate=pl.CostEstimate(
            flops=int(flops),
            transcendentals=0,
            bytes_accessed=int(bytes_accessed),
        ),
    )(tgt, w_blk)

    # Packed (n_packed, pack*d_model) reshapes row-major to (n_pad, d_model)
    # bit-exactly; drop padding rows, restore leading dims.
    return out.reshape(n_pad, d_model)[:n].reshape(*orig_shape, d_model)


def make_fixed_embedding(c_in: int, d_model: int, *, tile_n: int = 8192):
    """Build the table & block-diagonal weight ONCE; returns (apply_fn, table)."""
    w = _fixed_embedding_table(c_in, d_model)

    # Lane-packing factor so the output block is 128 lanes wide.
    if d_model < 128 and 128 % d_model == 0:
        pack = 128 // d_model
    else:
        pack = 1

    # Block-diagonal table: kron(I_pack, w) -> (pack*c_in, pack*d_model),
    # built & uploaded once (perf review: hoist out of the per-call path).
    w_blk = w if pack == 1 else jnp.kron(jnp.eye(pack, dtype=w.dtype), w)
    w_blk = jax.device_put(w_blk)

    def apply(x):
        return _fixed_embedding_call(
            x, w_blk, c_in=c_in, d_model=d_model, pack=pack, tile_n=tile_n
        )

    return apply, w


if __name__ == "__main__":
    c_in, d_model = 24, 32        # e.g. an hour-of-day embedding
    B, L = 2, 8

    embed, w = make_fixed_embedding(c_in, d_model)

    key = jax.random.PRNGKey(0)
    x = jax.random.randint(key, (B, L), 0, c_in, dtype=jnp.int32)

    out = embed(x)
    out = jax.block_until_ready(out)

    # Reference: plain gather (what nn.Embedding.forward does).
    ref = jnp.take(w, x, axis=0)
    assert out.shape == (B, L, d_model), out.shape
    assert jnp.allclose(out, ref, atol=1e-6, rtol=0.0), "mismatch vs reference gather"

    print("KERNEL_OK")
</pallas_src>

<mosaic_0001>
module attributes {stable_mosaic.version = 11 : i64} {
  func.func @_embed_kernel(%arg0: i32, %arg1: memref<8x4xi32, #tpu.memory_space<vmem>>, %arg2: memref<96x128xf32, #tpu.memory_space<vmem>>, %arg3: memref<8x128xf32, #tpu.memory_space<vmem>>) attributes {dimension_semantics = [#tpu.dimension_semantics<parallel>], iteration_bounds = array<i64: 1>, scalar_prefetch = 0 : i64, scratch_operands = 0 : i64, tpu.core_type = #tpu.core_type<tc>, window_params = [{transform_indices = @transform_0, window_bounds = array<i64: 8, 4>}, {pipeline_mode = #tpu.pipeline_mode<synchronous>, transform_indices = @transform_1, window_bounds = array<i64: 96, 128>}, {transform_indices = @transform_2, window_bounds = array<i64: 8, 128>}]} {
    %c0 = arith.constant 0 : index
    %c0_0 = arith.constant 0 : index
    %0 = vector.load %arg1[%c0, %c0_0] : memref<8x4xi32, #tpu.memory_space<vmem>>, vector<8x4xi32>
    %1 = tpu.iota {dimensions = array<i32: 1>} : vector<8x96xi32>
    %cst = arith.constant 0.000000e+00 : f32
    %2 = vector.broadcast %cst : f32 to vector<8x96xf32>
    %3 = vector.extract_strided_slice %0 {offsets = [0, 0], sizes = [8, 1], strides = [1, 1]} : vector<8x4xi32> to vector<8x1xi32>
    %4 = vector.broadcast %3 : vector<8x1xi32> to vector<8x96xi32>
    %5 = arith.cmpi eq, %1, %4 : vector<8x96xi32>
    %cst_1 = arith.constant 1.000000e+00 : f32
    %6 = vector.broadcast %cst_1 : f32 to vector<8x96xf32>
    %7 = arith.select %5, %6, %2 : vector<8x96xi1>, vector<8x96xf32>
    %8 = vector.extract_strided_slice %0 {offsets = [0, 1], sizes = [8, 1], strides = [1, 1]} : vector<8x4xi32> to vector<8x1xi32>
    %9 = vector.broadcast %8 : vector<8x1xi32> to vector<8x96xi32>
    %10 = arith.cmpi eq, %1, %9 : vector<8x96xi32>
    %cst_2 = arith.constant 1.000000e+00 : f32
    %11 = vector.broadcast %cst_2 : f32 to vector<8x96xf32>
    %12 = arith.select %10, %11, %7 : vector<8x96xi1>, vector<8x96xf32>
    %13 = vector.extract_strided_slice %0 {offsets = [0, 2], sizes = [8, 1], strides = [1, 1]} : vector<8x4xi32> to vector<8x1xi32>
    %14 = vector.broadcast %13 : vector<8x1xi32> to vector<8x96xi32>
    %15 = arith.cmpi eq, %1, %14 : vector<8x96xi32>
    %cst_3 = arith.constant 1.000000e+00 : f32
    %16 = vector.broadcast %cst_3 : f32 to vector<8x96xf32>
    %17 = arith.select %15, %16, %12 : vector<8x96xi1>, vector<8x96xf32>
    %18 = vector.extract_strided_slice %0 {offsets = [0, 3], sizes = [8, 1], strides = [1, 1]} : vector<8x4xi32> to vector<8x1xi32>
    %19 = vector.broadcast %18 : vector<8x1xi32> to vector<8x96xi32>
    %20 = arith.cmpi eq, %1, %19 : vector<8x96xi32>
    %cst_4 = arith.constant 1.000000e+00 : f32
    %21 = vector.broadcast %cst_4 : f32 to vector<8x96xf32>
    %22 = arith.select %20, %21, %17 : vector<8x96xi1>, vector<8x96xf32>
    %c0_5 = arith.constant 0 : index
    %c0_6 = arith.constant 0 : index
    %23 = vector.load %arg2[%c0_5, %c0_6] : memref<96x128xf32, #tpu.memory_space<vmem>>, vector<96x128xf32>
    %cst_7 = arith.constant dense<0.000000e+00> : vector<8x128xf32>
    %24 = tpu.matmul %22, %23, %cst_7 {dimension_numbers = #tpu.dot_dimension_numbers<[1], [0], [0], [1], [0, 0, 1, 1], [], []>, precision = #tpu.contract_precision<fp32>} : vector<8x96xf32>, vector<96x128xf32>, vector<8x128xf32> -> vector<8x128xf32>
    %c0_8 = arith.constant 0 : index
    %c0_9 = arith.constant 0 : index
    %25 = vector.load %arg3[%c0_8, %c0_9] : memref<8x128xf32, #tpu.memory_space<vmem>>, vector<8x128xf32>
    tpu.vector_store %arg3[%c0_8, %c0_9], %24 {strides = array<i32>} : memref<8x128xf32, #tpu.memory_space<vmem>>, vector<8x128xf32>,
    return
  }
  func.func @transform_0(%arg0: i32) -> (i32, i32) {
    %c0_i32 = arith.constant 0 : i32
    %c0_i32_0 = arith.constant 0 : i32
    return %arg0, %c0_i32 : i32, i32
  }
  func.func @transform_1(%arg0: i32) -> (i32, i32) {
    %c0_i32 = arith.constant 0 : i32
    %c0_i32_0 = arith.constant 0 : i32
    %c0_i32_1 = arith.constant 0 : i32
    return %c0_i32, %c0_i32_0 : i32, i32
  }
  func.func @transform_2(%arg0: i32) -> (i32, i32) {
    %c0_i32 = arith.constant 0 : i32
    %c0_i32_0 = arith.constant 0 : i32
    return %arg0, %c0_i32 : i32, i32
  }
}

</mosaic_0001>

<llo_original>
// kernel: tpu_custom_call.1
$region0: #{tpu_custom_call.1}
  #allocation0 [shape = 'u32[]', space=smem, size = 0x4, offset = 0x4, fixed_abs, tag = 'smem constant byte address 0x4 - core index']
  #allocation1 [shape = 'u32[144,128]{1,0:T(1,128)}', space=vmem, size = 0x12000, scoped, tag = 'internal scratch']
  %s0 = inlined_call_operand.vmem [shape: s32[8,4], index: 0, kind: input, shape index: {}]
  %s1 = inlined_call_operand.hbm [shape: f32[96,128], index: 1, kind: input, shape index: {}]
  %s2 = inlined_call_operand.hbm [shape: f32[8,128], index: 2, kind: output, shape index: {}]
  %s3 = sld [smem:[#allocation0]]
  $region22: #{tpu_custom_call.1} parent=0
    _
  %s5 = ssub.s32 1, %s3
  %s6 = scalar_select 0, %s5, %s3
  $region1: #{tpu_custom_call.1} parent=0
    #allocation2 [shape = 'u8[49152]{0}', space=vmem, size = 0xc000, scoped, tag = 'input window, operand 1, single buffered']
    #allocation3 [shape = 's32[1]{0}', space=sflag, size = 0x4, scoped, tag = 'scoped memory for tpu_custom_call.1']
    #allocation4 [shape = 's32[1]{0}', space=sflag, size = 0x4, scoped, tag = 'scoped memory for tpu_custom_call.1']
    #allocation5 [shape = 'u8[4096]{0}', space=vmem, size = 0x1000, scoped, tag = 'output window, operand 0, single buffered']
    %7 = vsyncpa [#allocation3], 0
    %8 = vsyncpa [#allocation4], 0
    // Predicated region
    $region2: #{tpu_custom_call.1} parent=1 // pred_check
      _
    $region3: #{tpu_custom_call.1} parent=1 // pred_check_branch
      %10 = sbr.rel (0) target = $region5
    $region4: #{tpu_custom_call.1} parent=1 // pred_region
      _
    $region5: #{tpu_custom_call.1} parent=1 // pred_fallthru
      _
    // Predicated region
    $region6: #{tpu_custom_call.1} parent=1 // pred_check
      _
    $region7: #{tpu_custom_call.1} parent=1 // pred_check_branch
      %12 = sbr.rel (0) target = $region9
    $region8: #{tpu_custom_call.1} parent=1 // pred_region
      %s14 = ssub.s32 1536, 1536
      %15 = vsyncadd [#allocation3], %s14
      %s16 = sshll.u32 [#allocation2], 4
      %s17 = int_to_ptr.vmem [resolvable:$true] %s16
      %22 = dma.hbm_to_vmem [thread:$0]  %s1, 1536, %s17, [#allocation3], 128, 128, 8
    $region9: #{tpu_custom_call.1} parent=1 // pred_fallthru
      _
    // Predicated region
    $region10: #{tpu_custom_call.1} parent=1 // pred_check
      _
    $region11: #{tpu_custom_call.1} parent=1 // pred_check_branch
      %24 = sbr.rel (0) target = $region13
    $region12: #{tpu_custom_call.1} parent=1 // pred_region
      %25 = dma.done [#allocation3], 1536
    $region13: #{tpu_custom_call.1} parent=1 // pred_fallthru
      _
    %v26 = vld [vmem:[%s0] sm:$0xff]
    %v27 = vlaneseq
    %v28 = vand.u32 %v27, 127
    %29 = vset.pattern.permute.xlu0 0
    %30 = vperm.xlu0 %29, %v26
    %v31 = vpop.permute.xlu0 %30
    %vm32 = vcmp.eq.s32.totalorder %v28, %v31
    %v33 = vsel %vm32, 1.0, 0.0
    %34 = vset.pattern.permute.xlu0 1
    %35 = vperm.xlu0 %34, %v26
    %v36 = vpop.permute.xlu0 %35
    %vm37 = vcmp.eq.s32.totalorder %v28, %v36
    %v38 = vsel %vm37, 1.0, %v33
    %39 = vset.pattern.permute.xlu0 2
    %40 = vperm.xlu0 %39, %v26
    %v41 = vpop.permute.xlu0 %40
    %vm42 = vcmp.eq.s32.totalorder %v28, %v41
    %v43 = vsel %vm42, 1.0, %v38
    %44 = vset.pattern.permute.xlu0 3
    %45 = vperm.xlu0 %44, %v26
    %v46 = vpop.permute.xlu0 %45
    %vm47 = vcmp.eq.s32.totalorder %v28, %v46
    %v48 = vsel %vm47, 1.0, %v43
    %v49 = vld [vmem:[#allocation2] sm:$0xff]
    %v50 = vld [vmem:[#allocation2 + $0x8] sm:$0xff]
    %v51 = vld [vmem:[#allocation2 + $0x10] sm:$0xff]
    %v52 = vld [vmem:[#allocation2 + $0x18] sm:$0xff]
    %v53 = vld [vmem:[#allocation2 + $0x20] sm:$0xff]
    %v54 = vld [vmem:[#allocation2 + $0x28] sm:$0xff]
    %v55 = vld [vmem:[#allocation2 + $0x30] sm:$0xff]
    %v56 = vld [vmem:[#allocation2 + $0x38] sm:$0xff]
    %v57 = vld [vmem:[#allocation2 + $0x40] sm:$0xff]
    %v58 = vld [vmem:[#allocation2 + $0x48] sm:$0xff]
    %v59 = vld [vmem:[#allocation2 + $0x50] sm:$0xff]
    %v60 = vld [vmem:[#allocation2 + $0x58] sm:$0xff]
    %vm61 = vcmask 785408
    %v63 = vsel %vm61, %v48, 0
    %65 = vmatprep.subr.mxu0 0.0
    %v66 = vand.u32 %v49, 4294901760
    %67 = vmatpush1.msra.mxu0 %v66
    %68 = vmatprep.subr.mxu0 0.0
    %v69 = vand.u32 %v50, 4294901760
    %70 = vmatpush1.msra.mxu0 %v69
    %71 = vmatprep.subr.mxu0 0.0
    %v72 = vand.u32 %v51, 4294901760
    %73 = vmatpush1.msra.mxu0 %v72
    %74 = vmatprep.subr.mxu0 0.0
    %v75 = vand.u32 %v52, 4294901760
    %76 = vmatpush1.msra.mxu0 %v75
    %77 = vmatprep.subr.mxu0 0.0
    %v78 = vand.u32 %v53, 4294901760
    %79 = vmatpush1.msra.mxu0 %v78
    %80 = vmatprep.subr.mxu0 0.0
    %v81 = vand.u32 %v54, 4294901760
    %82 = vmatpush1.msra.mxu0 %v81
    %83 = vmatprep.subr.mxu0 0.0
    %v84 = vand.u32 %v55, 4294901760
    %85 = vmatpush1.msra.mxu0 %v84
    %86 = vmatprep.subr.mxu0 0.0
    %v87 = vand.u32 %v56, 4294901760
    %88 = vmatpush1.msra.mxu0 %v87
    %89 = vmatprep.subr.mxu0 0.0
    %v90 = vand.u32 %v57, 4294901760
    %91 = vmatpush1.msra.mxu0 %v90
    %92 = vmatprep.subr.mxu0 0.0
    %v93 = vand.u32 %v58, 4294901760
    %94 = vmatpush1.msra.mxu0 %v93
    %95 = vmatprep.subr.mxu0 0.0
    %v96 = vand.u32 %v59, 4294901760
    %97 = vmatpush1.msra.mxu0 %v96
    %98 = vmatprep.subr.mxu0 0.0
    %v99 = vand.u32 %v60, 4294901760
    %100 = vmatpush1.msra.mxu0 %v99
    %101 = vmatprep.subr.mxu0 0.0
    %102 = vmatpush1.msra.mxu0 0.0
    %103 = vmatprep.subr.mxu0 0.0
    %104 = vmatpush1.msra.mxu0 0.0
    %105 = vmatprep.subr.mxu0 0.0
    %106 = vmatpush1.msra.mxu0 0.0
    %107 = vmatprep.subr.mxu0 0.0
    %108 = vmatpush1.msra.mxu0 0.0
    %109 = vmatprep.subr.mxu0 0.0
    %110 = vmatpush1.msra.mxu0 0.0
    %111 = vmatprep.subr.mxu0 0.0
    %112 = vmatpush1.msra.mxu0 0.0
    %113 = vmatprep.subr.mxu0 0.0
    %114 = vmatpush1.msra.mxu0 0.0
    %115 = vmatprep.subr.mxu0 0.0
    %116 = vmatpush1.msra.mxu0 0.0
    %117 = vmatprep.subr.mxu0 0.0
    %118 = vmatpush1.msra.mxu0 0.0
    %119 = vmatprep.subr.mxu0 0.0
    %120 = vmatpush1.msra.mxu0 0.0
    %121 = vmatprep.subr.mxu0 0.0
    %122 = vmatpush1.msra.mxu0 0.0
    %123 = vmatprep.subr.mxu0 0.0
    %124 = vmatpush1.msra.mxu0 0.0
    %125 = vmatprep.subr.mxu0 0.0
    %126 = vmatpush1.msra.mxu0 0.0
    %127 = vmatprep.subr.mxu0 0.0
    %128 = vmatpush1.msra.mxu0 0.0
    %129 = vmatprep.subr.mxu0 0.0
    %130 = vmatpush1.msra.mxu0 0.0
    %131 = vmatprep.subr.mxu0 0.0
    %132 = vmatpush1.msra.mxu0 0.0
    %133 = vmatprep.subr.mxu0 0.0
    %134 = vmatpush1.msra.mxu0 0.0
    %135 = vmatprep.subr.mxu0 0.0
    %136 = vmatpush1.msra.mxu0 0.0
    %137 = vmatprep.subr.mxu0 0.0
    %138 = vmatpush1.msra.mxu0 0.0
    %139 = vmatprep.subr.mxu0 0.0
    %140 = vmatpush1.msra.mxu0 0.0
    %141 = vmatprep.mubr.f32.mxu0 0.0
    %v142 = vand.u32 %v63, 4294901760
    %v143 = vsub.f32 %v63, %v142
    %v144 = vand.u32 %v143, 4294901760
    %v145 = vsub.f32 %v143, %v144
    %v146 = vand.u32 %v145, 4294901760
    %147 = vmatmul.mubr.f32.gmra.mrb[0].mxu0 %v146
    %v148 = vpop.f32.mrb[0].mxu0
    %v149 = vadd.f32 0.0, %v148
    %v150 = vpop.f32.mrb[0].mxu0
    %151 = vdwg.mxu0
    %152 = vmatprep.subr.mxu0 0.0
    %v153 = vand.u32 %v49, 4294901760
    %v154 = vsub.f32 %v49, %v153
    %v155 = vand.u32 %v154, 4294901760
    %v156 = vsub.f32 %v154, %v155
    %v157 = vand.u32 %v156, 4294901760
    %158 = vmatpush1.msra.mxu0 %v157
    %159 = vmatprep.subr.mxu0 0.0
    %v160 = vand.u32 %v50, 4294901760
    %v161 = vsub.f32 %v50, %v160
    %v162 = vand.u32 %v161, 4294901760
    %v163 = vsub.f32 %v161, %v162
    %v164 = vand.u32 %v163, 4294901760
    %165 = vmatpush1.msra.mxu0 %v164
    %166 = vmatprep.subr.mxu0 0.0
    %v167 = vand.u32 %v51, 4294901760
    %v168 = vsub.f32 %v51, %v167
    %v169 = vand.u32 %v168, 4294901760
    %v170 = vsub.f32 %v168, %v169
    %v171 = vand.u32 %v170, 4294901760
    %172 = vmatpush1.msra.mxu0 %v171
    %173 = vmatprep.subr.mxu0 0.0
    %v174 = vand.u32 %v52, 4294901760
    %v175 = vsub.f32 %v52, %v174
    %v176 = vand.u32 %v175, 4294901760
    %v177 = vsub.f32 %v175, %v176
    %v178 = vand.u32 %v177, 4294901760
    %179 = vmatpush1.msra.mxu0 %v178
    %180 = vmatprep.subr.mxu0 0.0
    %v181 = vand.u32 %v53, 4294901760
    %v182 = vsub.f32 %v53, %v181
    %v183 = vand.u32 %v182, 4294901760
    %v184 = vsub.f32 %v182, %v183
    %v185 = vand.u32 %v184, 4294901760
    %186 = vmatpush1.msra.mxu0 %v185
    %187 = vmatprep.subr.mxu0 0.0
    %v188 = vand.u32 %v54, 4294901760
    %v189 = vsub.f32 %v54, %v188
    %v190 = vand.u32 %v189, 4294901760
    %v191 = vsub.f32 %v189, %v190
    %v192 = vand.u32 %v191, 4294901760
    %193 = vmatpush1.msra.mxu0 %v192
    %194 = vmatprep.subr.mxu0 0.0
    %v195 = vand.u32 %v55, 4294901760
    %v196 = vsub.f32 %v55, %v195
    %v197 = vand.u32 %v196, 4294901760
    %v198 = vsub.f32 %v196, %v197
    %v199 = vand.u32 %v198, 4294901760
    %200 = vmatpush1.msra.mxu0 %v199
    %201 = vmatprep.subr.mxu0 0.0
    %v202 = vand.u32 %v56, 4294901760
    %v203 = vsub.f32 %v56, %v202
    %v204 = vand.u32 %v203, 4294901760
    %v205 = vsub.f32 %v203, %v204
    %v206 = vand.u32 %v205, 4294901760
    %207 = vmatpush1.msra.mxu0 %v206
    %208 = vmatprep.subr.mxu0 0.0
    %v209 = vand.u32 %v57, 4294901760
    %v210 = vsub.f32 %v57, %v209
    %v211 = vand.u32 %v210, 4294901760
    %v212 = vsub.f32 %v210, %v211
    %v213 = vand.u32 %v212, 4294901760
    %214 = vmatpush1.msra.mxu0 %v213
    %215 = vmatprep.subr.mxu0 0.0
    %v216 = vand.u32 %v58, 4294901760
    %v217 = vsub.f32 %v58, %v216
    %v218 = vand.u32 %v217, 4294901760
    %v219 = vsub.f32 %v217, %v218
    %v220 = vand.u32 %v219, 4294901760
    %221 = vmatpush1.msra.mxu0 %v220
    %222 = vmatprep.subr.mxu0 0.0
    %v223 = vand.u32 %v59, 4294901760
    %v224 = vsub.f32 %v59, %v223
    %v225 = vand.u32 %v224, 4294901760
    %v226 = vsub.f32 %v224, %v225
    %v227 = vand.u32 %v226, 4294901760
    %228 = vmatpush1.msra.mxu0 %v227
    %229 = vmatprep.subr.mxu0 0.0
    %v230 = vand.u32 %v60, 4294901760
    %v231 = vsub.f32 %v60, %v230
    %v232 = vand.u32 %v231, 4294901760
    %v233 = vsub.f32 %v231, %v232
    %v234 = vand.u32 %v233, 4294901760
    %235 = vmatpush1.msra.mxu0 %v234
    %236 = vmatprep.subr.mxu0 0.0
    %237 = vmatpush1.msra.mxu0 0.0
    %238 = vmatprep.subr.mxu0 0.0
    %239 = vmatpush1.msra.mxu0 0.0
    %240 = vmatprep.subr.mxu0 0.0
    %241 = vmatpush1.msra.mxu0 0.0
    %242 = vmatprep.subr.mxu0 0.0
    %243 = vmatpush1.msra.mxu0 0.0
    %244 = vmatprep.subr.mxu0 0.0
    %245 = vmatpush1.msra.mxu0 0.0
    %246 = vmatprep.subr.mxu0 0.0
    %247 = vmatpush1.msra.mxu0 0.0
    %248 = vmatprep.subr.mxu0 0.0
    %249 = vmatpush1.msra.mxu0 0.0
    %250 = vmatprep.subr.mxu0 0.0
    %251 = vmatpush1.msra.mxu0 0.0
    %252 = vmatprep.subr.mxu0 0.0
    %253 = vmatpush1.msra.mxu0 0.0
    %254 = vmatprep.subr.mxu0 0.0
    %255 = vmatpush1.msra.mxu0 0.0
    %256 = vmatprep.subr.mxu0 0.0
    %257 = vmatpush1.msra.mxu0 0.0
    %258 = vmatprep.subr.mxu0 0.0
    %259 = vmatpush1.msra.mxu0 0.0
    %260 = vmatprep.subr.mxu0 0.0
    %261 = vmatpush1.msra.mxu0 0.0
    %262 = vmatprep.subr.mxu0 0.0
    %263 = vmatpush1.msra.mxu0 0.0
    %264 = vmatprep.subr.mxu0 0.0
    %265 = vmatpush1.msra.mxu0 0.0
    %266 = vmatprep.subr.mxu0 0.0
    %267 = vmatpush1.msra.mxu0 0.0
    %268 = vmatprep.subr.mxu0 0.0
    %269 = vmatpush1.msra.mxu0 0.0
    %270 = vmatprep.subr.mxu0 0.0
    %271 = vmatpush1.msra.mxu0 0.0
    %272 = vmatprep.subr.mxu0 0.0
    %273 = vmatpush1.msra.mxu0 0.0
    %274 = vmatprep.subr.mxu0 0.0
    %275 = vmatpush1.msra.mxu0 0.0
    %276 = vmatprep.mubr.f32.mxu0 0.0
    %v277 = vand.u32 %v63, 4294901760
    %278 = vmatmul.mubr.f32.gmra.mrb[0].mxu0 %v277
    %v279 = vpop.f32.mrb[0].mxu0
    %v280 = vadd.f32 %v149, %v279
    %v281 = vpop.f32.mrb[0].mxu0
    %282 = vdwg.mxu0
    %283 = vmatprep.subr.mxu0 0.0
    %v284 = vand.u32 %v49, 4294901760
    %v285 = vsub.f32 %v49, %v284
    %286 = vmatpush1.msra.mxu0 %v285
    %287 = vmatprep.subr.mxu0 0.0
    %v288 = vand.u32 %v50, 4294901760
    %v289 = vsub.f32 %v50, %v288
    %290 = vmatpush1.msra.mxu0 %v289
    %291 = vmatprep.subr.mxu0 0.0
    %v292 = vand.u32 %v51, 4294901760
    %v293 = vsub.f32 %v51, %v292
    %294 = vmatpush1.msra.mxu0 %v293
    %295 = vmatprep.subr.mxu0 0.0
    %v296 = vand.u32 %v52, 4294901760
    %v297 = vsub.f32 %v52, %v296
    %298 = vmatpush1.msra.mxu0 %v297
    %299 = vmatprep.subr.mxu0 0.0
    %v300 = vand.u32 %v53, 4294901760
    %v301 = vsub.f32 %v53, %v300
    %302 = vmatpush1.msra.mxu0 %v301
    %303 = vmatprep.subr.mxu0 0.0
    %v304 = vand.u32 %v54, 4294901760
    %v305 = vsub.f32 %v54, %v304
    %306 = vmatpush1.msra.mxu0 %v305
    %307 = vmatprep.subr.mxu0 0.0
    %v308 = vand.u32 %v55, 4294901760
    %v309 = vsub.f32 %v55, %v308
    %310 = vmatpush1.msra.mxu0 %v309
    %311 = vmatprep.subr.mxu0 0.0
    %v312 = vand.u32 %v56, 4294901760
    %v313 = vsub.f32 %v56, %v312
    %314 = vmatpush1.msra.mxu0 %v313
    %315 = vmatprep.subr.mxu0 0.0
    %v316 = vand.u32 %v57, 4294901760
    %v317 = vsub.f32 %v57, %v316
    %318 = vmatpush1.msra.mxu0 %v317
    %319 = vmatprep.subr.mxu0 0.0
    %v320 = vand.u32 %v58, 4294901760
    %v321 = vsub.f32 %v58, %v320
    %322 = vmatpush1.msra.mxu0 %v321
    %323 = vmatprep.subr.mxu0 0.0
    %v324 = vand.u32 %v59, 4294901760
    %v325 = vsub.f32 %v59, %v324
    %326 = vmatpush1.msra.mxu0 %v325
    %327 = vmatprep.subr.mxu0 0.0
    %v328 = vand.u32 %v60, 4294901760
    %v329 = vsub.f32 %v60, %v328
    %330 = vmatpush1.msra.mxu0 %v329
    %331 = vmatprep.subr.mxu0 0.0
    %332 = vmatpush1.msra.mxu0 0.0
    %333 = vmatprep.subr.mxu0 0.0
    %334 = vmatpush1.msra.mxu0 0.0
    %335 = vmatprep.subr.mxu0 0.0
    %336 = vmatpush1.msra.mxu0 0.0
    %337 = vmatprep.subr.mxu0 0.0
    %338 = vmatpush1.msra.mxu0 0.0
    %339 = vmatprep.subr.mxu0 0.0
    %340 = vmatpush1.msra.mxu0 0.0
    %341 = vmatprep.subr.mxu0 0.0
    %342 = vmatpush1.msra.mxu0 0.0
    %343 = vmatprep.subr.mxu0 0.0
    %344 = vmatpush1.msra.mxu0 0.0
    %345 = vmatprep.subr.mxu0 0.0
    %346 = vmatpush1.msra.mxu0 0.0
    %347 = vmatprep.subr.mxu0 0.0
    %348 = vmatpush1.msra.mxu0 0.0
    %349 = vmatprep.subr.mxu0 0.0
    %350 = vmatpush1.msra.mxu0 0.0
    %351 = vmatprep.subr.mxu0 0.0
    %352 = vmatpush1.msra.mxu0 0.0
    %353 = vmatprep.subr.mxu0 0.0
    %354 = vmatpush1.msra.mxu0 0.0
    %355 = vmatprep.subr.mxu0 0.0
    %356 = vmatpush1.msra.mxu0 0.0
    %357 = vmatprep.subr.mxu0 0.0
    %358 = vmatpush1.msra.mxu0 0.0
    %359 = vmatprep.subr.mxu0 0.0
    %360 = vmatpush1.msra.mxu0 0.0
    %361 = vmatprep.subr.mxu0 0.0
    %362 = vmatpush1.msra.mxu0 0.0
    %363 = vmatprep.subr.mxu0 0.0
    %364 = vmatpush1.msra.mxu0 0.0
    %365 = vmatprep.subr.mxu0 0.0
    %366 = vmatpush1.msra.mxu0 0.0
    %367 = vmatprep.subr.mxu0 0.0
    %368 = vmatpush1.msra.mxu0 0.0
    %369 = vmatprep.subr.mxu0 0.0
    %370 = vmatpush1.msra.mxu0 0.0
    %371 = vmatprep.mubr.f32.mxu0 0.0
    %v372 = vand.u32 %v63, 4294901760
    %v373 = vsub.f32 %v63, %v372
    %374 = vmatmul.mubr.f32.gmra.mrb[0].mxu0 %v373
    %v375 = vpop.f32.mrb[0].mxu0
    %v376 = vadd.f32 %v280, %v375
    %v377 = vpop.f32.mrb[0].mxu0
    %378 = vdwg.mxu0
    %379 = vmatprep.subr.mxu0 0.0
    %v380 = vand.u32 %v49, 4294901760
    %381 = vmatpush1.msra.mxu0 %v380
    %382 = vmatprep.subr.mxu0 0.0
    %v383 = vand.u32 %v50, 4294901760
    %384 = vmatpush1.msra.mxu0 %v383
    %385 = vmatprep.subr.mxu0 0.0
    %v386 = vand.u32 %v51, 4294901760
    %387 = vmatpush1.msra.mxu0 %v386
    %388 = vmatprep.subr.mxu0 0.0
    %v389 = vand.u32 %v52, 4294901760
    %390 = vmatpush1.msra.mxu0 %v389
    %391 = vmatprep.subr.mxu0 0.0
    %v392 = vand.u32 %v53, 4294901760
    %393 = vmatpush1.msra.mxu0 %v392
    %394 = vmatprep.subr.mxu0 0.0
    %v395 = vand.u32 %v54, 4294901760
    %396 = vmatpush1.msra.mxu0 %v395
    %397 = vmatprep.subr.mxu0 0.0
    %v398 = vand.u32 %v55, 4294901760
    %399 = vmatpush1.msra.mxu0 %v398
    %400 = vmatprep.subr.mxu0 0.0
    %v401 = vand.u32 %v56, 4294901760
    %402 = vmatpush1.msra.mxu0 %v401
    %403 = vmatprep.subr.mxu0 0.0
    %v404 = vand.u32 %v57, 4294901760
    %405 = vmatpush1.msra.mxu0 %v404
    %406 = vmatprep.subr.mxu0 0.0
    %v407 = vand.u32 %v58, 4294901760
    %408 = vmatpush1.msra.mxu0 %v407
    %409 = vmatprep.subr.mxu0 0.0
    %v410 = vand.u32 %v59, 4294901760
    %411 = vmatpush1.msra.mxu0 %v410
    %412 = vmatprep.subr.mxu0 0.0
    %v413 = vand.u32 %v60, 4294901760
    %414 = vmatpush1.msra.mxu0 %v413
    %415 = vmatprep.subr.mxu0 0.0
    %416 = vmatpush1.msra.mxu0 0.0
    %417 = vmatprep.subr.mxu0 0.0
    %418 = vmatpush1.msra.mxu0 0.0
    %419 = vmatprep.subr.mxu0 0.0
    %420 = vmatpush1.msra.mxu0 0.0
    %421 = vmatprep.subr.mxu0 0.0
    %422 = vmatpush1.msra.mxu0 0.0
    %423 = vmatprep.subr.mxu0 0.0
    %424 = vmatpush1.msra.mxu0 0.0
    %425 = vmatprep.subr.mxu0 0.0
    %426 = vmatpush1.msra.mxu0 0.0
    %427 = vmatprep.subr.mxu0 0.0
    %428 = vmatpush1.msra.mxu0 0.0
    %429 = vmatprep.subr.mxu0 0.0
    %430 = vmatpush1.msra.mxu0 0.0
    %431 = vmatprep.subr.mxu0 0.0
    %432 = vmatpush1.msra.mxu0 0.0
    %433 = vmatprep.subr.mxu0 0.0
    %434 = vmatpush1.msra.mxu0 0.0
    %435 = vmatprep.subr.mxu0 0.0
    %436 = vmatpush1.msra.mxu0 0.0
    %437 = vmatprep.subr.mxu0 0.0
    %438 = vmatpush1.msra.mxu0 0.0
    %439 = vmatprep.subr.mxu0 0.0
    %440 = vmatpush1.msra.mxu0 0.0
    %441 = vmatprep.subr.mxu0 0.0
    %442 = vmatpush1.msra.mxu0 0.0
    %443 = vmatprep.subr.mxu0 0.0
    %444 = vmatpush1.msra.mxu0 0.0
    %445 = vmatprep.subr.mxu0 0.0
    %446 = vmatpush1.msra.mxu0 0.0
    %447 = vmatprep.subr.mxu0 0.0
    %448 = vmatpush1.msra.mxu0 0.0
    %449 = vmatprep.subr.mxu0 0.0
    %450 = vmatpush1.msra.mxu0 0.0
    %451 = vmatprep.subr.mxu0 0.0
    %452 = vmatpush1.msra.mxu0 0.0
    %453 = vmatprep.subr.mxu0 0.0
    %454 = vmatpush1.msra.mxu0 0.0
    %455 = vmatprep.mubr.f32.mxu0 0.0
    %v456 = vand.u32 %v63, 4294901760
    %v457 = vsub.f32 %v63, %v456
    %v458 = vand.u32 %v457, 4294901760
    %459 = vmatmul.mubr.f32.gmra.mrb[0].mxu0 %v458
    %v460 = vpop.f32.mrb[0].mxu0
    %v461 = vadd.f32 %v376, %v460
    %v462 = vpop.f32.mrb[0].mxu0
    %463 = vdwg.mxu0
    %464 = vmatprep.subr.mxu0 0.0
    %v465 = vand.u32 %v49, 4294901760
    %v466 = vsub.f32 %v49, %v465
    %v467 = vand.u32 %v466, 4294901760
    %468 = vmatpush1.msra.mxu0 %v467
    %469 = vmatprep.subr.mxu0 0.0
    %v470 = vand.u32 %v50, 4294901760
    %v471 = vsub.f32 %v50, %v470
    %v472 = vand.u32 %v471, 4294901760
    %473 = vmatpush1.msra.mxu0 %v472
    %474 = vmatprep.subr.mxu0 0.0
    %v475 = vand.u32 %v51, 4294901760
    %v476 = vsub.f32 %v51, %v475
    %v477 = vand.u32 %v476, 4294901760
    %478 = vmatpush1.msra.mxu0 %v477
    %479 = vmatprep.subr.mxu0 0.0
    %v480 = vand.u32 %v52, 4294901760
    %v481 = vsub.f32 %v52, %v480
    %v482 = vand.u32 %v481, 4294901760
    %483 = vmatpush1.msra.mxu0 %v482
    %484 = vmatprep.subr.mxu0 0.0
    %v485 = vand.u32 %v53, 4294901760
    %v486 = vsub.f32 %v53, %v485
    %v487 = vand.u32 %v486, 4294901760
    %488 = vmatpush1.msra.mxu0 %v487
    %489 = vmatprep.subr.mxu0 0.0
    %v490 = vand.u32 %v54, 4294901760
    %v491 = vsub.f32 %v54, %v490
    %v492 = vand.u32 %v491, 4294901760
    %493 = vmatpush1.msra.mxu0 %v492
    %494 = vmatprep.subr.mxu0 0.0
    %v495 = vand.u32 %v55, 4294901760
    %v496 = vsub.f32 %v55, %v495
    %v497 = vand.u32 %v496, 4294901760
    %498 = vmatpush1.msra.mxu0 %v497
    %499 = vmatprep.subr.mxu0 0.0
    %v500 = vand.u32 %v56, 4294901760
    %v501 = vsub.f32 %v56, %v500
    %v502 = vand.u32 %v501, 4294901760
    %503 = vmatpush1.msra.mxu0 %v502
    %504 = vmatprep.subr.mxu0 0.0
    %v505 = vand.u32 %v57, 4294901760
    %v506 = vsub.f32 %v57, %v505
    %v507 = vand.u32 %v506, 4294901760
    %508 = vmatpush1.msra.mxu0 %v507
    %509 = vmatprep.subr.mxu0 0.0
    %v510 = vand.u32 %v58, 4294901760
    %v511 = vsub.f32 %v58, %v510
    %v512 = vand.u32 %v511, 4294901760
    %513 = vmatpush1.msra.mxu0 %v512
    %514 = vmatprep.subr.mxu0 0.0
    %v515 = vand.u32 %v59, 4294901760
    %v516 = vsub.f32 %v59, %v515
    %v517 = vand.u32 %v516, 4294901760
    %518 = vmatpush1.msra.mxu0 %v517
    %519 = vmatprep.subr.mxu0 0.0
    %v520 = vand.u32 %v60, 4294901760
    %v521 = vsub.f32 %v60, %v520
    %v522 = vand.u32 %v521, 4294901760
    %523 = vmatpush1.msra.mxu0 %v522
    %524 = vmatprep.subr.mxu0 0.0
    %525 = vmatpush1.msra.mxu0 0.0
    %526 = vmatprep.subr.mxu0 0.0
    %527 = vmatpush1.msra.mxu0 0.0
    %528 = vmatprep.subr.mxu0 0.0
    %529 = vmatpush1.msra.mxu0 0.0
    %530 = vmatprep.subr.mxu0 0.0
    %531 = vmatpush1.msra.mxu0 0.0
    %532 = vmatprep.subr.mxu0 0.0
    %533 = vmatpush1.msra.mxu0 0.0
    %534 = vmatprep.subr.mxu0 0.0
    %535 = vmatpush1.msra.mxu0 0.0
    %536 = vmatprep.subr.mxu0 0.0
    %537 = vmatpush1.msra.mxu0 0.0
    %538 = vmatprep.subr.mxu0 0.0
    %539 = vmatpush1.msra.mxu0 0.0
    %540 = vmatprep.subr.mxu0 0.0
    %541 = vmatpush1.msra.mxu0 0.0
    %542 = vmatprep.subr.mxu0 0.0
    %543 = vmatpush1.msra.mxu0 0.0
    %544 = vmatprep.subr.mxu0 0.0
    %545 = vmatpush1.msra.mxu0 0.0
    %546 = vmatprep.subr.mxu0 0.0
    %547 = vmatpush1.msra.mxu0 0.0
    %548 = vmatprep.subr.mxu0 0.0
    %549 = vmatpush1.msra.mxu0 0.0
    %550 = vmatprep.subr.mxu0 0.0
    %551 = vmatpush1.msra.mxu0 0.0
    %552 = vmatprep.subr.mxu0 0.0
    %553 = vmatpush1.msra.mxu0 0.0
    %554 = vmatprep.subr.mxu0 0.0
    %555 = vmatpush1.msra.mxu0 0.0
    %556 = vmatprep.subr.mxu0 0.0
    %557 = vmatpush1.msra.mxu0 0.0
    %558 = vmatprep.subr.mxu0 0.0
    %559 = vmatpush1.msra.mxu0 0.0
    %560 = vmatprep.subr.mxu0 0.0
    %561 = vmatpush1.msra.mxu0 0.0
    %562 = vmatprep.subr.mxu0 0.0
    %563 = vmatpush1.msra.mxu0 0.0
    %564 = vmatprep.mubr.f32.mxu0 0.0
    %v565 = vand.u32 %v63, 4294901760
    %566 = vmatmul.mubr.f32.gmra.mrb[0].mxu0 %v565
    %v567 = vpop.f32.mrb[0].mxu0
    %v568 = vadd.f32 %v461, %v567
    %v569 = vpop.f32.mrb[0].mxu0
    %570 = vdwg.mxu0
    %571 = vmatprep.subr.mxu0 0.0
    %v572 = vand.u32 %v49, 4294901760
    %573 = vmatpush1.msra.mxu0 %v572
    %574 = vmatprep.subr.mxu0 0.0
    %v575 = vand.u32 %v50, 4294901760
    %576 = vmatpush1.msra.mxu0 %v575
    %577 = vmatprep.subr.mxu0 0.0
    %v578 = vand.u32 %v51, 4294901760
    %579 = vmatpush1.msra.mxu0 %v578
    %580 = vmatprep.subr.mxu0 0.0
    %v581 = vand.u32 %v52, 4294901760
    %582 = vmatpush1.msra.mxu0 %v581
    %583 = vmatprep.subr.mxu0 0.0
    %v584 = vand.u32 %v53, 4294901760
    %585 = vmatpush1.msra.mxu0 %v584
    %586 = vmatprep.subr.mxu0 0.0
    %v587 = vand.u32 %v54, 4294901760
    %588 = vmatpush1.msra.mxu0 %v587
    %589 = vmatprep.subr.mxu0 0.0
    %v590 = vand.u32 %v55, 4294901760
    %591 = vmatpush1.msra.mxu0 %v590
    %592 = vmatprep.subr.mxu0 0.0
    %v593 = vand.u32 %v56, 4294901760
    %594 = vmatpush1.msra.mxu0 %v593
    %595 = vmatprep.subr.mxu0 0.0
    %v596 = vand.u32 %v57, 4294901760
    %597 = vmatpush1.msra.mxu0 %v596
    %598 = vmatprep.subr.mxu0 0.0
    %v599 = vand.u32 %v58, 4294901760
    %600 = vmatpush1.msra.mxu0 %v599
    %601 = vmatprep.subr.mxu0 0.0
    %v602 = vand.u32 %v59, 4294901760
    %603 = vmatpush1.msra.mxu0 %v602
    %604 = vmatprep.subr.mxu0 0.0
    %v605 = vand.u32 %v60, 4294901760
    %606 = vmatpush1.msra.mxu0 %v605
    %607 = vmatprep.subr.mxu0 0.0
    %608 = vmatpush1.msra.mxu0 0.0
    %609 = vmatprep.subr.mxu0 0.0
    %610 = vmatpush1.msra.mxu0 0.0
    %611 = vmatprep.subr.mxu0 0.0
    %612 = vmatpush1.msra.mxu0 0.0
    %613 = vmatprep.subr.mxu0 0.0
    %614 = vmatpush1.msra.mxu0 0.0
    %615 = vmatprep.subr.mxu0 0.0
    %616 = vmatpush1.msra.mxu0 0.0
    %617 = vmatprep.subr.mxu0 0.0
    %618 = vmatpush1.msra.mxu0 0.0
    %619 = vmatprep.subr.mxu0 0.0
    %620 = vmatpush1.msra.mxu0 0.0
    %621 = vmatprep.subr.mxu0 0.0
    %622 = vmatpush1.msra.mxu0 0.0
    %623 = vmatprep.subr.mxu0 0.0
    %624 = vmatpush1.msra.mxu0 0.0
    %625 = vmatprep.subr.mxu0 0.0
    %626 = vmatpush1.msra.mxu0 0.0
    %627 = vmatprep.subr.mxu0 0.0
    %628 = vmatpush1.msra.mxu0 0.0
    %629 = vmatprep.subr.mxu0 0.0
    %630 = vmatpush1.msra.mxu0 0.0
    %631 = vmatprep.subr.mxu0 0.0
    %632 = vmatpush1.msra.mxu0 0.0
    %633 = vmatprep.subr.mxu0 0.0
    %634 = vmatpush1.msra.mxu0 0.0
    %635 = vmatprep.subr.mxu0 0.0
    %636 = vmatpush1.msra.mxu0 0.0
    %637 = vmatprep.subr.mxu0 0.0
    %638 = vmatpush1.msra.mxu0 0.0
    %639 = vmatprep.subr.mxu0 0.0
    %640 = vmatpush1.msra.mxu0 0.0
    %641 = vmatprep.subr.mxu0 0.0
    %642 = vmatpush1.msra.mxu0 0.0
    %643 = vmatprep.subr.mxu0 0.0
    %644 = vmatpush1.msra.mxu0 0.0
    %645 = vmatprep.subr.mxu0 0.0
    %646 = vmatpush1.msra.mxu0 0.0
    %647 = vmatprep.mubr.f32.mxu0 0.0
    %v648 = vand.u32 %v63, 4294901760
    %649 = vmatmul.mubr.f32.gmra.mrb[0].mxu0 %v648
    %v650 = vpop.f32.mrb[0].mxu0
    %v651 = vadd.f32 %v568, %v650
    %v652 = vpop.f32.mrb[0].mxu0
    %653 = vdwg.mxu0
    %654 = vst [vmem:[#allocation5] sm:$0xff] %v651
    // Predicated region
    $region14: #{tpu_custom_call.1} parent=1 // pred_check
      _
    $region15: #{tpu_custom_call.1} parent=1 // pred_check_branch
      %656 = sbr.rel (0) target = $region17
    $region16: #{tpu_custom_call.1} parent=1 // pred_region
      %s658 = ssub.s32 128, 128
      %659 = vsyncadd [#allocation4], %s658
      %s661 = sshll.u32 [#allocation5], 4
      %s662 = int_to_ptr.vmem [resolvable:$true] %s661
      %664 = dma.vmem_to_hbm [thread:$0]  %s662, 128, %s2, [#allocation4]
    $region17: #{tpu_custom_call.1} parent=1 // pred_fallthru
      _
    // Predicated region
    $region18: #{tpu_custom_call.1} parent=1 // pred_check
      _
    $region19: #{tpu_custom_call.1} parent=1 // pred_check_branch
      %666 = sbr.rel (0) target = $region21
    $region20: #{tpu_custom_call.1} parent=1 // pred_region
      %667 = dma.done [#allocation4], 128
    $region21: #{tpu_custom_call.1} parent=1 // pred_fallthru
      _
    %668 = vsyncpa [#allocation3], 1
    %669 = vsyncpa [#allocation4], 1

</llo_original>
